<compile_context>
chip_gen: v5e
topology: v5e:2x2
jax: 0.10.0
libtpu: 0.0.40
codegen_flags: <defaults>
</compile_context>

<pallas_src>
import functools

import jax
import jax.numpy as jnp
from jax.experimental import pallas as pl
from jax.experimental.pallas import tpu as pltpu


def _label_smoothing_kernel(x_ref, t_ref, out_ref, *,
                            confidence, smooth_coef,
                            row_tile, tiles_per_slice,
                            n_valid_rows, needs_mask,
                            acc_rows, fold):
    c = pl.program_id(0)   # parallel axis (megacore split on multi-TC chips)
    k = pl.program_id(1)   # reduction axis over row tiles

    @pl.when(k == 0)
    def _():
        out_ref[...] = jnp.zeros_like(out_ref)

    x = x_ref[...].astype(jnp.float32)
    t = t_ref[...].astype(jnp.float32)

    # Numerically stable softplus term shared by both BCE losses.
    sp = jnp.maximum(x, 0.0) + jnp.log1p(jnp.exp(-jnp.abs(x)))

    # Fused per-element loss (valid because confidence + smoothing == 1):
    #   confidence*(sp - x*t) + smoothing*(sp - 0.1*x)
    #     == sp - x*(confidence*t + 0.1*smoothing)
    val = sp - x * (jnp.float32(confidence) * t + jnp.float32(smooth_coef))

    d = val.shape[-1]
    w = d // fold   # accumulator lane width (128 when D % 128 == 0, else D)

    def accumulate(v):
        # Row fold: (row_tile, d) -> (acc_rows, d); groups of `acc_rows` rows
        # align with the sublane tiling, so this stays pure VPU adds.
        r = v.reshape(row_tile // acc_rows, acc_rows, d).sum(axis=0)
        # Lane fold: static, vreg-aligned 128-wide slices -> (acc_rows, w).
        s = r[:, :w]
        for j in range(1, fold):
            s = s + r[:, j * w:(j + 1) * w]
        out_ref[...] += s.reshape(out_ref.shape)

    if needs_mask:
        # Only the boundary tile (and any clamped overshoot tile) can contain
        # invalid rows; gate the mask behind a scalar predicate so interior
        # tiles pay nothing for it.
        row_start = (c * tiles_per_slice + k) * row_tile
        is_boundary = row_start + row_tile > n_valid_rows

        @pl.when(is_boundary)
        def _():
            rows = row_start + jax.lax.broadcasted_iota(jnp.int32, val.shape, 0)
            # `where` selects, so garbage/NaN from out-of-bounds edge rows
            # never reaches the accumulator.
            accumulate(jnp.where(rows < n_valid_rows, val, jnp.float32(0.0)))

        @pl.when(jnp.logical_not(is_boundary))
        def _():
            accumulate(val)
    else:
        accumulate(val)


def _num_tensorcores():
    """Generation-aware TensorCore count: 2 on v7x-class chips, else 1."""
    try:
        kind = jax.devices()[0].device_kind.lower()
        if "v7" in kind or "7x" in kind:
            return 2
    except Exception:
        pass
    return 1


def label_smoothing_loss(x, target, smoothing=0.1, *,
                         target_tile_bytes=4 * 1024 * 1024,
                         num_splits=None):
    """Training-mode LabelSmoothing loss (scalar). x, target: same-shape float arrays."""
    assert x.shape == target.shape
    # Collapse leading dims; the mean is over all elements anyway.
    x2 = x.reshape(-1, x.shape[-1])
    t2 = target.reshape(-1, target.shape[-1])
    N, D = x2.shape

    confidence = 1.0 - smoothing
    smooth_coef = 0.1 * smoothing
    total_count = N * D

    def _cdiv(a, b):
        return (a + b - 1) // b

    itemsize = jnp.dtype(x2.dtype).itemsize
    # Dtype-native sublane packing: 8 rows (f32), 16 (bf16), 32 (int8/fp8).
    pack = max(8, 32 // max(1, itemsize))

    # Row tile: ~target_tile_bytes per input block (capped at 8 MiB so the
    # 2-input x 2-buffer pipeline stays well inside v7x's VMEM), rounded to
    # the packing, never starting a block past the end of the array.
    tile_budget = min(int(target_tile_bytes), 8 << 20)
    row_tile = max(pack, (tile_budget // max(1, D * itemsize)) // pack * pack)
    if N >= pack:
        row_tile = min(row_tile, (N // pack) * pack)
    else:
        row_tile = N   # single full-extent block (block dim == full array dim)

    total_tiles = _cdiv(N, row_tile)

    # Megacore split across TensorCores ("parallel" grid axis).
    cores = num_splits if num_splits is not None else _num_tensorcores()
    splits = max(1, min(cores, total_tiles))
    tiles_per_slice = _cdiv(total_tiles, splits)
    overshoot = splits * tiles_per_slice != total_tiles
    needs_mask = (N % row_tile != 0) or overshoot

    # Folded partial-sum accumulator shape.
    acc_rows = 8 if row_tile % 8 == 0 else 1
    fold = D // 128 if (D % 128 == 0 and D >= 128) else 1
    acc_width = D // fold

    # VMEM budget: 2 inputs x 2 pipeline buffers x tile + partials + slack.
    tile_bytes = row_tile * D * itemsize
    vmem_need = 4 * tile_bytes + 2 * (acc_rows * acc_width * 4) + (4 << 20)
    vmem_limit = int(min(max(vmem_need, 16 << 20), 40 << 20))
    vmem_limit = int(max(vmem_limit, vmem_need))   # never request < actual need

    # Block-index map; clamp only when the split grid overshoots the tile
    # count (the overshoot steps are fully masked in the kernel).
    last_block = total_tiles - 1
    if overshoot:
        def _block_idx(c, k):
            return jnp.minimum(c * tiles_per_slice + k, last_block)
    else:
        def _block_idx(c, k):
            return c * tiles_per_slice + k

    def _in_map(c, k):
        return (_block_idx(c, k), 0)

    kernel = functools.partial(
        _label_smoothing_kernel,
        confidence=confidence,
        smooth_coef=smooth_coef,
        row_tile=row_tile,
        tiles_per_slice=tiles_per_slice,
        n_valid_rows=N,
        needs_mask=needs_mask,
        acc_rows=acc_rows,
        fold=fold,
    )

    partials = pl.pallas_call(
        kernel,
        out_shape=jax.ShapeDtypeStruct((splits, acc_rows, acc_width), jnp.float32),
        grid_spec=pltpu.PrefetchScalarGridSpec(
            num_scalar_prefetch=0,
            grid=(splits, tiles_per_slice),
            in_specs=[
                pl.BlockSpec((row_tile, D), _in_map),
                pl.BlockSpec((row_tile, D), _in_map),
            ],
            out_specs=pl.BlockSpec((1, acc_rows, acc_width), lambda c, k: (c, 0, 0)),
        ),
        compiler_params=pltpu.CompilerParams(
            dimension_semantics=("parallel", "arbitrary"),
            vmem_limit_bytes=vmem_limit,
        ),
    )(x2, t2)

    # Tiny final reduction + mean in the wrapper (f32 throughout).
    return jnp.sum(partials, dtype=jnp.float32) / jnp.float32(total_count)


def _label_smoothing_ref(x, target, smoothing=0.1):
    """Pure-JAX reference matching PyTorch exactly (two separate BCE means)."""
    confidence = 1.0 - smoothing
    x = x.astype(jnp.float32)
    t = target.astype(jnp.float32)
    sp = jnp.maximum(x, 0.0) + jnp.log1p(jnp.exp(-jnp.abs(x)))
    bce_t = jnp.mean(sp - x * t)
    bce_s = jnp.mean(sp - x * 0.1)
    return confidence * bce_t + smoothing * bce_s


if __name__ == "__main__":
    k0, k1, k2, k3 = jax.random.split(jax.random.PRNGKey(0), 4)

    # Divisible path: 16 rows x 128 features.
    N, D = 16, 128
    x = jax.random.normal(k0, (N, D), dtype=jnp.float32)
    target = jax.random.uniform(k1, (N, D), dtype=jnp.float32)  # BCE targets in [0,1]

    loss = jax.block_until_ready(label_smoothing_loss(x, target, smoothing=0.1))
    ref = _label_smoothing_ref(x, target, smoothing=0.1)
    assert jnp.allclose(loss, ref, rtol=1e-5, atol=1e-5), (loss, ref)

    # Ragged path: 13 rows -> partial edge block + gated in-kernel mask
    # (no wrapper-side jnp.pad anymore).
    loss2 = jax.block_until_ready(label_smoothing_loss(x[:13], target[:13], smoothing=0.1))
    ref2 = _label_smoothing_ref(x[:13], target[:13], smoothing=0.1)
    assert jnp.allclose(loss2, ref2, rtol=1e-5, atol=1e-5), (loss2, ref2)

    # Wider feature dim exercises the lane fold into the (8, 128) accumulator.
    xw = jax.random.normal(k2, (24, 256), dtype=jnp.float32)
    tw = jax.random.uniform(k3, (24, 256), dtype=jnp.float32)
    loss3 = jax.block_until_ready(label_smoothing_loss(xw, tw, smoothing=0.1))
    ref3 = _label_smoothing_ref(xw, tw, smoothing=0.1)
    assert jnp.allclose(loss3, ref3, rtol=1e-5, atol=1e-5), (loss3, ref3)

    # bf16 inputs exercise the 16-row sublane packing; accumulation stays f32.
    xb = x.astype(jnp.bfloat16)
    tb = target.astype(jnp.bfloat16)
    loss4 = jax.block_until_ready(label_smoothing_loss(xb, tb, smoothing=0.1))
    ref4 = _label_smoothing_ref(xb, tb, smoothing=0.1)
    assert jnp.allclose(loss4, ref4, rtol=1e-4, atol=1e-4), (loss4, ref4)

    print("KERNEL_OK")
</pallas_src>

<mosaic_0001>
module attributes {stable_mosaic.version = 11 : i64} {
  func.func @_label_smoothing_kernel(%arg0: i32, %arg1: i32, %arg2: memref<16x128xf32, #tpu.memory_space<vmem>>, %arg3: memref<16x128xf32, #tpu.memory_space<vmem>>, %arg4: memref<1x8x128xf32, #tpu.memory_space<vmem>>) attributes {dimension_semantics = [#tpu.dimension_semantics<parallel>, #tpu.dimension_semantics<arbitrary>], iteration_bounds = array<i64: 1, 1>, scalar_prefetch = 0 : i64, scratch_operands = 0 : i64, tpu.core_type = #tpu.core_type<tc>, window_params = [{transform_indices = @transform_0, window_bounds = array<i64: 16, 128>}, {transform_indices = @transform_1, window_bounds = array<i64: 16, 128>}, {transform_indices = @transform_2, window_bounds = array<i64: 1, 8, 128>}]} {
    %c0_i32 = arith.constant 0 : i32
    %0 = arith.cmpi eq, %arg1, %c0_i32 : i32
    %1 = arith.extui %0 : i1 to i32
    %c0_i32_0 = arith.constant 0 : i32
    %2 = arith.cmpi ne, %1, %c0_i32_0 : i32
    scf.if %2 {
      %cst_14 = arith.constant 0.000000e+00 : f32
      %25 = vector.broadcast %cst_14 : f32 to vector<1x8x128xf32>
      %c0_15 = arith.constant 0 : index
      %c0_16 = arith.constant 0 : index
      %c0_17 = arith.constant 0 : index
      %26 = vector.load %arg4[%c0_15, %c0_16, %c0_17] : memref<1x8x128xf32, #tpu.memory_space<vmem>>, vector<1x8x128xf32>
      tpu.vector_store %arg4[%c0_15, %c0_16, %c0_17], %25 {strides = array<i32>} : memref<1x8x128xf32, #tpu.memory_space<vmem>>, vector<1x8x128xf32>,
    } else {
    }
    %c0 = arith.constant 0 : index
    %c0_1 = arith.constant 0 : index
    %3 = vector.load %arg2[%c0, %c0_1] : memref<16x128xf32, #tpu.memory_space<vmem>>, vector<16x128xf32>
    %c0_2 = arith.constant 0 : index
    %c0_3 = arith.constant 0 : index
    %4 = vector.load %arg3[%c0_2, %c0_3] : memref<16x128xf32, #tpu.memory_space<vmem>>, vector<16x128xf32>
    %cst = arith.constant 0.000000e+00 : f32
    %5 = vector.broadcast %cst : f32 to vector<16x128xf32>
    %6 = arith.maximumf %3, %5 : vector<16x128xf32>
    %7 = math.absf %3 : vector<16x128xf32>
    %cst_4 = arith.constant 0.000000e+00 : f32
    %8 = vector.broadcast %cst_4 : f32 to vector<16x128xf32>
    %9 = arith.subf %8, %7 : vector<16x128xf32>
    %10 = math.exp %9 : vector<16x128xf32>
    %11 = math.log1p %10 : vector<16x128xf32>
    %12 = arith.addf %6, %11 : vector<16x128xf32>
    %cst_5 = arith.constant 0.899999976 : f32
    %13 = vector.broadcast %cst_5 : f32 to vector<16x128xf32>
    %14 = arith.mulf %13, %4 : vector<16x128xf32>
    %cst_6 = arith.constant 0.00999999977 : f32
    %15 = vector.broadcast %cst_6 : f32 to vector<16x128xf32>
    %16 = arith.addf %14, %15 : vector<16x128xf32>
    %17 = arith.mulf %3, %16 : vector<16x128xf32>
    %18 = arith.subf %12, %17 : vector<16x128xf32>
    %19 = vector.shape_cast %18 : vector<16x128xf32> to vector<2x8x128xf32>
    %cst_7 = arith.constant dense<0.000000e+00> : vector<8x128xf32>
    %20 = vector.multi_reduction <add>, %19, %cst_7 [0] : vector<2x8x128xf32> to vector<8x128xf32>
    %c0_8 = arith.constant 0 : index
    %c0_9 = arith.constant 0 : index
    %c0_10 = arith.constant 0 : index
    %21 = vector.load %arg4[%c0_8, %c0_9, %c0_10] : memref<1x8x128xf32, #tpu.memory_space<vmem>>, vector<1x8x128xf32>
    %22 = vector.shape_cast %20 : vector<8x128xf32> to vector<1x8x128xf32>
    %23 = arith.addf %21, %22 : vector<1x8x128xf32>
    %c0_11 = arith.constant 0 : index
    %c0_12 = arith.constant 0 : index
    %c0_13 = arith.constant 0 : index
    %24 = vector.load %arg4[%c0_11, %c0_12, %c0_13] : memref<1x8x128xf32, #tpu.memory_space<vmem>>, vector<1x8x128xf32>
    tpu.vector_store %arg4[%c0_11, %c0_12, %c0_13], %23 {strides = array<i32>} : memref<1x8x128xf32, #tpu.memory_space<vmem>>, vector<1x8x128xf32>,
    return
  }
  func.func @transform_0(%arg0: i32, %arg1: i32) -> (i32, i32) {
    %c1_i32 = arith.constant 1 : i32
    %0 = arith.muli %arg0, %c1_i32 : i32
    %1 = arith.addi %0, %arg1 : i32
    %c0_i32 = arith.constant 0 : i32
    %c0_i32_0 = arith.constant 0 : i32
    return %1, %c0_i32 : i32, i32
  }
  func.func @transform_1(%arg0: i32, %arg1: i32) -> (i32, i32) {
    %c1_i32 = arith.constant 1 : i32
    %0 = arith.muli %arg0, %c1_i32 : i32
    %1 = arith.addi %0, %arg1 : i32
    %c0_i32 = arith.constant 0 : i32
    %c0_i32_0 = arith.constant 0 : i32
    return %1, %c0_i32 : i32, i32
  }
  func.func @transform_2(%arg0: i32, %arg1: i32) -> (i32, i32, i32) {
    %c0_i32 = arith.constant 0 : i32
    %c0_i32_0 = arith.constant 0 : i32
    %c0_i32_1 = arith.constant 0 : i32
    return %arg0, %c0_i32, %c0_i32_0 : i32, i32, i32
  }
}

</mosaic_0001>

<llo_original>
// kernel: tpu_custom_call.1
$region0: #{tpu_custom_call.1}
  #allocation0 [shape = 'u32[]', space=smem, size = 0x4, offset = 0x4, fixed_abs, tag = 'smem constant byte address 0x4 - core index']
  #allocation1 [shape = 'u32[72,128]{1,0:T(1,128)}', space=vmem, size = 0x9000, scoped, tag = 'internal scratch']
  %s0 = inlined_call_operand.hbm [shape: f32[16,128], index: 0, kind: input, shape index: {}]
  %s1 = inlined_call_operand.hbm [shape: f32[16,128], index: 1, kind: input, shape index: {}]
  %s2 = inlined_call_operand.hbm [shape: f32[1,8,128], index: 2, kind: output, shape index: {}]
  %s3 = sld [smem:[#allocation0]]
  $region30: #{tpu_custom_call.1} parent=0
    _
  %s5 = ssub.s32 1, %s3
  %s6 = scalar_select 0, %s5, %s3
  $region1: #{tpu_custom_call.1} parent=0
    #allocation2 [shape = 'u8[8192]{0}', space=vmem, size = 0x2000, scoped, tag = 'input window, operand 0, single buffered']
    #allocation3 [shape = 's32[1]{0}', space=sflag, size = 0x4, scoped, tag = 'scoped memory for tpu_custom_call.1']
    #allocation4 [shape = 's32[1]{0}', space=sflag, size = 0x4, scoped, tag = 'scoped memory for tpu_custom_call.1']
    #allocation5 [shape = 'u8[8192]{0}', space=vmem, size = 0x2000, scoped, tag = 'input window, operand 1, single buffered']
    #allocation6 [shape = 's32[1]{0}', space=sflag, size = 0x4, scoped, tag = 'scoped memory for tpu_custom_call.1']
    #allocation7 [shape = 'u8[4096]{0}', space=vmem, size = 0x1000, scoped, tag = 'output window, operand 0, single buffered']
    %7 = vsyncpa [#allocation3], 0
    %8 = vsyncpa [#allocation6], 0
    %9 = vsyncpa [#allocation4], 0
    // Predicated region
    $region2: #{tpu_custom_call.1} parent=1 // pred_check
      _
    $region3: #{tpu_custom_call.1} parent=1 // pred_check_branch
      %11 = sbr.rel (0) target = $region5
    $region4: #{tpu_custom_call.1} parent=1 // pred_region
      %s12 = sadd.s32 0, 0
      %s13 = smul.u32 2, %s12
      %15 = vsyncadd [#allocation3], 0
      %s16 = smul.addr %s13, 8
      %s17 = scalar_lea.hbm %s0, %s16
      %s18 = sshll.u32 %s17, 4
      %s19 = int_to_ptr.hbm [resolvable:$true] %s18
      %s20 = sshll.u32 [#allocation2], 4
      %s21 = int_to_ptr.vmem [resolvable:$true] %s20
      %26 = dma.hbm_to_vmem [thread:$0]  %s19, 256, %s21, [#allocation3], 128, 128, 8
    $region5: #{tpu_custom_call.1} parent=1 // pred_fallthru
      _
    // Predicated region
    $region6: #{tpu_custom_call.1} parent=1 // pred_check
      _
    $region7: #{tpu_custom_call.1} parent=1 // pred_check_branch
      %28 = sbr.rel (0) target = $region9
    $region8: #{tpu_custom_call.1} parent=1 // pred_region
      %s29 = sadd.s32 0, 0
      %s30 = smul.u32 2, %s29
      %32 = vsyncadd [#allocation6], 0
      %s33 = smul.addr %s30, 8
      %s34 = scalar_lea.hbm %s1, %s33
      %s35 = sshll.u32 %s34, 4
      %s36 = int_to_ptr.hbm [resolvable:$true] %s35
      %s37 = sshll.u32 [#allocation5], 4
      %s38 = int_to_ptr.vmem [resolvable:$true] %s37
      %43 = dma.hbm_to_vmem [thread:$0]  %s36, 256, %s38, [#allocation6], 128, 128, 8
    $region9: #{tpu_custom_call.1} parent=1 // pred_fallthru
      _
    // Predicated region
    $region10: #{tpu_custom_call.1} parent=1 // pred_check
      _
    $region11: #{tpu_custom_call.1} parent=1 // pred_check_branch
      %45 = sbr.rel (0) target = $region13
    $region12: #{tpu_custom_call.1} parent=1 // pred_region
      %47 = dma.done [#allocation3], 256
    $region13: #{tpu_custom_call.1} parent=1 // pred_fallthru
      _
    // Predicated region
    $region14: #{tpu_custom_call.1} parent=1 // pred_check
      _
    $region15: #{tpu_custom_call.1} parent=1 // pred_check_branch
      %49 = sbr.rel (0) target = $region17
    $region16: #{tpu_custom_call.1} parent=1 // pred_region
      %51 = dma.done [#allocation6], 256
    $region17: #{tpu_custom_call.1} parent=1 // pred_fallthru
      _
    %s52 = sadd.s32 0, 0
    %s53 = smul.u32 2, %s52
    %s54 = sadd.s32 0, 0
    %s55 = smul.u32 2, %s54
    %p56 = scmp.eq.s32.totalorder 0, 0
    // Predicated region
    $region18: #{tpu_custom_call.1} parent=1 // pred_check
      %p57 = pneg %p56
    $region19: #{tpu_custom_call.1} parent=1 // pred_check_branch
      %59 = sbr.rel (%p57) target = $region21
    $region20: #{tpu_custom_call.1} parent=1 // pred_region
      %60 = vst [vmem:[#allocation7] sm:$0xff] 0.0
    $region21: #{tpu_custom_call.1} parent=1 // pred_fallthru
      _
    %v61 = vld [vmem:[#allocation2] sm:$0xff]
    %v62 = vld [vmem:[#allocation2 + $0x8] sm:$0xff]
    %v63 = vld [vmem:[#allocation5] sm:$0xff]
    %v64 = vld [vmem:[#allocation5 + $0x8] sm:$0xff]
    %v65 = vmax.f32 %v61, 0.0
    %v66 = vmax.f32 %v62, 0.0
    %v67 = vand.u32 2147483647, %v61
    %v68 = vand.u32 2147483647, %v62
    %v69 = vsub.f32 0.0, %v67
    %v70 = vsub.f32 0.0, %v68
    %v71 = vmul.f32 %v69, 1.442695
    %v72 = vpow.pop %v71
    %v73 = vmul.f32 %v70, 1.442695
    %v74 = vpow.pop %v73
    %v75 = vadd.f32 %v72, 1.0
    %v76 = vlog2.pop %v75
    %v77 = vmul.f32 %v76, 0.6931472
    %v78 = vmul.f32 -0.5, %v72
    %v79 = vadd.f32 %v78, 1.0
    %v80 = vmul.f32 %v79, %v72
    %v81 = vand.u32 2147483647, %v72
    %vm82 = vcmp.lt.f32.partialorder %v81, 0.0004427343
    %v83 = vsel %vm82, %v80, %v77
    %v84 = vadd.f32 %v74, 1.0
    %v85 = vlog2.pop %v84
    %v86 = vmul.f32 %v85, 0.6931472
    %v87 = vmul.f32 -0.5, %v74
    %v88 = vadd.f32 %v87, 1.0
    %v89 = vmul.f32 %v88, %v74
    %v90 = vand.u32 2147483647, %v74
    %vm91 = vcmp.lt.f32.partialorder %v90, 0.0004427343
    %v92 = vsel %vm91, %v89, %v86
    %v93 = vadd.f32 %v65, %v83
    %v94 = vadd.f32 %v66, %v92
    %v95 = vmul.f32 %v63, 0.9
    %v96 = vmul.f32 %v64, 0.9
    %v97 = vadd.f32 %v95, 0.01
    %v98 = vadd.f32 %v96, 0.01
    %v99 = vmul.f32 %v61, %v97
    %v100 = vmul.f32 %v62, %v98
    %v101 = vsub.f32 %v93, %v99
    %v102 = vsub.f32 %v94, %v100
    %v103 = vadd.f32 %v101, %v102
    %v104 = vld [vmem:[#allocation7] sm:$0xff]
    %v105 = vadd.f32 %v104, %v103
    %106 = vst [vmem:[#allocation7] sm:$0xff] %v105
    // Predicated region
    $region22: #{tpu_custom_call.1} parent=1 // pred_check
      _
    $region23: #{tpu_custom_call.1} parent=1 // pred_check_branch
      %108 = sbr.rel (0) target = $region25
    $region24: #{tpu_custom_call.1} parent=1 // pred_region
      %110 = vsyncadd [#allocation4], 0
      %s112 = sshll.u32 [#allocation7], 4
      %s113 = int_to_ptr.vmem [resolvable:$true] %s112
      %s114 = sshll.u32 %s2, 4
      %s115 = int_to_ptr.hbm [resolvable:$true] %s114
      %117 = dma.vmem_to_hbm [thread:$0]  %s113, 128, %s115, [#allocation4]
    $region25: #{tpu_custom_call.1} parent=1 // pred_fallthru
      _
    // Predicated region
    $region26: #{tpu_custom_call.1} parent=1 // pred_check
      _
    $region27: #{tpu_custom_call.1} parent=1 // pred_check_branch
      %119 = sbr.rel (0) target = $region29
    $region28: #{tpu_custom_call.1} parent=1 // pred_region
      %121 = dma.done [#allocation4], 128
    $region29: #{tpu_custom_call.1} parent=1 // pred_fallthru
      _
    %122 = vsyncpa [#allocation3], 1
    %123 = vsyncpa [#allocation6], 1
    %124 = vsyncpa [#allocation4], 1

</llo_original>
